<compile_context>
chip_gen: v7x
topology: tpu7x:2x2x1
jax: 0.10.0
libtpu: 0.0.40
codegen_flags: <defaults>
</compile_context>

<pallas_src>
import functools

import jax
import jax.numpy as jnp
from jax import lax
from jax.experimental import pallas as pl
from jax.experimental.pallas import tpu as pltpu

EPS = 1e-5


# ----------------------------- fused Pallas kernel -----------------------------

def _instance_norm(y, inv_hw):
    """InstanceNorm2d(affine=False): single-pass per-channel stats over H*W lanes."""
    mean = jnp.sum(y, axis=1, keepdims=True) * inv_hw
    ex2 = jnp.sum(y * y, axis=1, keepdims=True) * inv_hw
    var = ex2 - mean * mean
    return (y - mean) * lax.rsqrt(var + EPS)


def _conv3x3_reflect(img, w, buf_ref, patches_ref, masks, W):
    """Reflect-pad(1) + 3x3 conv of img (C, H*W), entirely in VMEM.

    img is written into the centre of a margin-padded scratch; the nine shifted
    views are static lane slices of that scratch, corrected at the image border
    with reflection selects, packed into patches_ref (9C, HW), and contracted
    in a single K=9C MXU matmul against w (C_out, 9C).
    """
    C, HW = img.shape
    M = W + 1                                    # margin covers |shift| <= W+1
    col0, colL, row0, rowL = masks

    buf_ref[:, M:M + HW] = img

    # Shifted views S[s][c, p] == img[c, p + s]; out-of-image values are never
    # selected (they always sit under a reflection-correction mask below).
    sh = {}
    for oy in (-1, 0, 1):
        for ox in (-1, 0, 1):
            s = oy * W + ox
            sh[s] = buf_ref[:, M + s:M + s + HW]

    k = 0
    for oy in (-1, 0, 1):          # tap row    (dy = oy + 1)
        for ox in (-1, 0, 1):      # tap column (dx = ox + 1)
            tap = sh[oy * W + ox]
            if ox != 0:            # reflect across the left/right image edge
                col_bad = col0 if ox < 0 else colL
                tap = jnp.where(col_bad, sh[oy * W - ox], tap)
            if oy != 0:            # reflect across the top/bottom image edge
                row_bad = row0 if oy < 0 else rowL
                if ox != 0:
                    col_bad = col0 if ox < 0 else colL
                    alt = jnp.where(col_bad, sh[-oy * W - ox], sh[-oy * W + ox])
                else:
                    alt = sh[-oy * W + ox]
                tap = jnp.where(row_bad, alt, tap)
            patches_ref[k * C:(k + 1) * C, :] = tap
            k += 1

    return jnp.dot(w, patches_ref[...], preferred_element_type=jnp.float32)


def resnet_block_kernel(x_ref, w1_ref, w2_ref, o_ref, buf_ref, patches_ref, *, H, W):
    """Fused Conv3x3 -> IN -> ReLU -> Conv3x3 -> IN -> residual add."""
    C = x_ref.shape[1]
    HW = H * W
    inv_hw = 1.0 / HW

    # Border masks on the flattened spatial axis (shared by both convs).
    lane = lax.broadcasted_iota(jnp.int32, (C, HW), 1)
    xcol = lane % W
    masks = (xcol == 0, xcol == W - 1, lane < W, lane >= HW - W)

    buf_ref[...] = jnp.zeros(buf_ref.shape, buf_ref.dtype)   # clear pad margins

    x = x_ref[0]                                             # (C, HW) float32

    # Conv1 (single K=9C matmul) -> InstanceNorm -> ReLU.
    y = _conv3x3_reflect(x, w1_ref[...], buf_ref, patches_ref, masks, W)
    y = jnp.maximum(_instance_norm(y, inv_hw), 0.0)

    # Conv2 -> InstanceNorm -> residual add (intermediate never left VMEM).
    # TODO(synk): optionally cast taps/weights to bf16 for the MXU on v6e/v7x;
    # kept f32 here to hold the tight correctness tolerance.
    y = _conv3x3_reflect(y, w2_ref[...], buf_ref, patches_ref, masks, W)
    y = _instance_norm(y, inv_hw)

    o_ref[0] = x + y


# --------------------------------- JAX wrapper ----------------------------------

def _flatten_weight(w):
    """OIHW (C_out, C_in, 3, 3) -> (C_out, 9*C_in); column = (dy*3+dx)*C_in + c_in."""
    c_out, c_in = w.shape[0], w.shape[1]
    return jnp.transpose(w, (0, 2, 3, 1)).reshape(c_out, 9 * c_in)


@jax.jit
def resnet_block_forward(x, w1, b1, w2, b2):
    """Pallas ResnetBlock.forward on NCHW float32.

    b1/b2 are accepted for parameter parity with nn.Conv2d but unused: a
    per-channel bias followed by affine=False InstanceNorm is exactly cancelled
    by the mean subtraction.
    """
    del b1, b2
    N, C, H, W = x.shape
    HW = H * W

    x_flat = x.reshape(N, C, HW)
    w1f = _flatten_weight(w1)
    w2f = _flatten_weight(w2)

    # TODO(synk): at production pix2pixHD sizes (C~512, HW in the thousands) tile
    # C_out / HW (two-pass IN) and set vmem_limit_bytes; full-slab blocks below
    # are sized for the toy config used here.
    out_flat = pl.pallas_call(
        functools.partial(resnet_block_kernel, H=H, W=W),
        out_shape=jax.ShapeDtypeStruct((N, C, HW), jnp.float32),
        grid=(N,),
        in_specs=[
            pl.BlockSpec((1, C, HW), lambda n: (n, 0, 0)),
            pl.BlockSpec((C, 9 * C), lambda n: (0, 0)),   # grid-invariant weights
            pl.BlockSpec((C, 9 * C), lambda n: (0, 0)),
        ],
        out_specs=pl.BlockSpec((1, C, HW), lambda n: (n, 0, 0)),
        scratch_shapes=[
            pltpu.VMEM((C, HW + 2 * (W + 1)), jnp.float32),  # margin-padded slab
            pltpu.VMEM((9 * C, HW), jnp.float32),            # packed 3x3 taps
        ],
        compiler_params=pltpu.CompilerParams(
            dimension_semantics=("parallel",)),               # batch across TCs (v7x)
    )(x_flat, w1f, w2f)

    return out_flat.reshape(N, C, H, W)


# ------------------------------ pure-JAX reference -------------------------------

def _reference_forward(x, w1, b1, w2, b2):
    def conv(inp, w, b):
        xp = jnp.pad(inp, ((0, 0), (0, 0), (1, 1), (1, 1)), mode="reflect")
        y = lax.conv_general_dilated(
            xp, w, window_strides=(1, 1), padding="VALID",
            dimension_numbers=("NCHW", "OIHW", "NCHW"))
        return y + b[None, :, None, None]

    def inorm(y):
        mean = jnp.mean(y, axis=(2, 3), keepdims=True)
        var = jnp.mean((y - mean) ** 2, axis=(2, 3), keepdims=True)
        return (y - mean) * lax.rsqrt(var + EPS)

    h = jax.nn.relu(inorm(conv(x, w1, b1)))
    h = inorm(conv(h, w2, b2))
    return x + h


# -------------------------------------- main -------------------------------------

if __name__ == "__main__":
    # Small shapes consistent with the module: dim=8, batch=2, spatial 16x16.
    N, C, H, W = 2, 8, 16, 16

    key = jax.random.PRNGKey(0)
    kx, kw1, kb1, kw2, kb2 = jax.random.split(key, 5)

    x = jax.random.normal(kx, (N, C, H, W), dtype=jnp.float32)

    # Deterministic Conv2d-style init: U(-k, k), k = 1/sqrt(fan_in), fan_in = C*3*3.
    bound = 1.0 / jnp.sqrt(jnp.float32(C * 3 * 3))
    w1 = jax.random.uniform(kw1, (C, C, 3, 3), jnp.float32, -bound, bound)
    b1 = jax.random.uniform(kb1, (C,), jnp.float32, -bound, bound)
    w2 = jax.random.uniform(kw2, (C, C, 3, 3), jnp.float32, -bound, bound)
    b2 = jax.random.uniform(kb2, (C,), jnp.float32, -bound, bound)

    out = resnet_block_forward(x, w1, b1, w2, b2)
    out = jax.block_until_ready(out)

    ref = _reference_forward(x, w1, b1, w2, b2)
    assert out.shape == (N, C, H, W)
    assert jnp.allclose(out, ref, rtol=1e-3, atol=1e-3), "Pallas output mismatch vs reference"

    # TODO(synk): use_dropout=True branch (nn.Dropout(0.5)) not exercised; the
    # module's default config here is use_dropout=False.
    print("KERNEL_OK")
</pallas_src>

<mosaic_0001>
module attributes {stable_mosaic.version = 11 : i64} {
  func.func @resnet_block_kernel(%arg0: i32, %arg1: memref<1x8x256xf32, #tpu.memory_space<vmem>>, %arg2: memref<8x72xf32, #tpu.memory_space<vmem>>, %arg3: memref<8x72xf32, #tpu.memory_space<vmem>>, %arg4: memref<1x8x256xf32, #tpu.memory_space<vmem>>, %arg5: memref<8x290xf32, #tpu.memory_space<vmem>>, %arg6: memref<72x256xf32, #tpu.memory_space<vmem>>) attributes {dimension_semantics = [#tpu.dimension_semantics<parallel>], iteration_bounds = array<i64: 2>, scalar_prefetch = 0 : i64, scratch_operands = 2 : i64, tpu.core_type = #tpu.core_type<tc>, window_params = [{transform_indices = @transform_0, window_bounds = array<i64: 1, 8, 256>}, {pipeline_mode = #tpu.pipeline_mode<synchronous>, transform_indices = @transform_1, window_bounds = array<i64: 8, 72>}, {pipeline_mode = #tpu.pipeline_mode<synchronous>, transform_indices = @transform_2, window_bounds = array<i64: 8, 72>}, {transform_indices = @transform_3, window_bounds = array<i64: 1, 8, 256>}]} {
    %0 = tpu.iota {dimensions = array<i32: 1>} : vector<8x256xi32>
    %c16_i32 = arith.constant 16 : i32
    %c0_i32 = arith.constant 0 : i32
    %1 = arith.cmpi eq, %c16_i32, %c0_i32 : i32
    %c1_i32 = arith.constant 1 : i32
    %2 = arith.select %1, %c1_i32, %c16_i32 : i32
    %3 = vector.broadcast %2 : i32 to vector<8x256xi32>
    %4 = arith.remsi %0, %3 : vector<8x256xi32>
    %c0_i32_0 = arith.constant 0 : i32
    %5 = vector.broadcast %c0_i32_0 : i32 to vector<8x256xi32>
    %6 = arith.cmpi ne, %4, %5 : vector<8x256xi32>
    %c0_i32_1 = arith.constant 0 : i32
    %7 = vector.broadcast %c0_i32_1 : i32 to vector<8x256xi32>
    %8 = arith.cmpi slt, %4, %7 : vector<8x256xi32>
    %c0_i32_2 = arith.constant 0 : i32
    %9 = arith.cmpi slt, %2, %c0_i32_2 : i32
    %10 = vector.broadcast %9 : i1 to vector<8x256xi1>
    %11 = vector.broadcast %10 : vector<8x256xi1> to vector<8x256xi1>
    %12 = arith.xori %8, %11 : vector<8x256xi1>
    %13 = arith.andi %12, %6 : vector<8x256xi1>
    %14 = vector.broadcast %2 : i32 to vector<8x256xi32>
    %15 = arith.addi %4, %14 : vector<8x256xi32>
    %16 = arith.select %13, %15, %4 : vector<8x256xi1>, vector<8x256xi32>
    %c0_i32_3 = arith.constant 0 : i32
    %17 = vector.broadcast %c0_i32_3 : i32 to vector<8x256xi32>
    %18 = arith.cmpi eq, %16, %17 : vector<8x256xi32>
    %c15_i32 = arith.constant 15 : i32
    %19 = vector.broadcast %c15_i32 : i32 to vector<8x256xi32>
    %20 = arith.cmpi eq, %16, %19 : vector<8x256xi32>
    %c16_i32_4 = arith.constant 16 : i32
    %21 = vector.broadcast %c16_i32_4 : i32 to vector<8x256xi32>
    %22 = arith.cmpi slt, %0, %21 : vector<8x256xi32>
    %c240_i32 = arith.constant 240 : i32
    %23 = vector.broadcast %c240_i32 : i32 to vector<8x256xi32>
    %24 = arith.cmpi sge, %0, %23 : vector<8x256xi32>
    %cst = arith.constant 0.000000e+00 : f32
    %25 = vector.broadcast %cst : f32 to vector<8x290xf32>
    %c0 = arith.constant 0 : index
    %c0_5 = arith.constant 0 : index
    %26 = vector.load %arg5[%c0, %c0_5] : memref<8x290xf32, #tpu.memory_space<vmem>>, vector<8x290xf32>
    tpu.vector_store %arg5[%c0, %c0_5], %25 {strides = array<i32>} : memref<8x290xf32, #tpu.memory_space<vmem>>, vector<8x290xf32>,
    %c0_6 = arith.constant 0 : index
    %c0_7 = arith.constant 0 : index
    %c0_8 = arith.constant 0 : index
    %27 = vector.load %arg1[%c0_6, %c0_7, %c0_8] : memref<1x8x256xf32, #tpu.memory_space<vmem>>, vector<1x8x256xf32>
    %28 = vector.shape_cast %27 : vector<1x8x256xf32> to vector<8x256xf32>
    %c0_9 = arith.constant 0 : index
    %c0_10 = arith.constant 0 : index
    %29 = vector.load %arg2[%c0_9, %c0_10] : memref<8x72xf32, #tpu.memory_space<vmem>>, vector<8x72xf32>
    %c0_11 = arith.constant 0 : index
    %c17 = arith.constant 17 : index
    %30 = vector.load %arg5[%c0_11, %c17] : memref<8x290xf32, #tpu.memory_space<vmem>>, vector<8x256xf32>
    tpu.vector_store %arg5[%c0_11, %c17], %28 {strides = array<i32>} : memref<8x290xf32, #tpu.memory_space<vmem>>, vector<8x256xf32>,
    %c0_12 = arith.constant 0 : index
    %c0_13 = arith.constant 0 : index
    %31 = vector.load %arg5[%c0_12, %c0_13] : memref<8x290xf32, #tpu.memory_space<vmem>>, vector<8x256xf32>
    %c0_14 = arith.constant 0 : index
    %c1 = arith.constant 1 : index
    %32 = vector.load %arg5[%c0_14, %c1] : memref<8x290xf32, #tpu.memory_space<vmem>>, vector<8x256xf32>
    %c0_15 = arith.constant 0 : index
    %c2 = arith.constant 2 : index
    %33 = vector.load %arg5[%c0_15, %c2] : memref<8x290xf32, #tpu.memory_space<vmem>>, vector<8x256xf32>
    %c0_16 = arith.constant 0 : index
    %c16 = arith.constant 16 : index
    %34 = vector.load %arg5[%c0_16, %c16] : memref<8x290xf32, #tpu.memory_space<vmem>>, vector<8x256xf32>
    %c0_17 = arith.constant 0 : index
    %c17_18 = arith.constant 17 : index
    %35 = vector.load %arg5[%c0_17, %c17_18] : memref<8x290xf32, #tpu.memory_space<vmem>>, vector<8x256xf32>
    %c0_19 = arith.constant 0 : index
    %c18 = arith.constant 18 : index
    %36 = vector.load %arg5[%c0_19, %c18] : memref<8x290xf32, #tpu.memory_space<vmem>>, vector<8x256xf32>
    %c0_20 = arith.constant 0 : index
    %c32 = arith.constant 32 : index
    %37 = vector.load %arg5[%c0_20, %c32] : memref<8x290xf32, #tpu.memory_space<vmem>>, vector<8x256xf32>
    %c0_21 = arith.constant 0 : index
    %c33 = arith.constant 33 : index
    %38 = vector.load %arg5[%c0_21, %c33] : memref<8x290xf32, #tpu.memory_space<vmem>>, vector<8x256xf32>
    %c0_22 = arith.constant 0 : index
    %c34 = arith.constant 34 : index
    %39 = vector.load %arg5[%c0_22, %c34] : memref<8x290xf32, #tpu.memory_space<vmem>>, vector<8x256xf32>
    %40 = arith.select %18, %33, %31 : vector<8x256xi1>, vector<8x256xf32>
    %41 = arith.select %18, %39, %37 : vector<8x256xi1>, vector<8x256xf32>
    %42 = arith.select %22, %41, %40 : vector<8x256xi1>, vector<8x256xf32>
    %c0_23 = arith.constant 0 : index
    %c0_24 = arith.constant 0 : index
    %43 = vector.load %arg6[%c0_23, %c0_24] : memref<72x256xf32, #tpu.memory_space<vmem>>, vector<8x256xf32>
    tpu.vector_store %arg6[%c0_23, %c0_24], %42 {strides = array<i32>} : memref<72x256xf32, #tpu.memory_space<vmem>>, vector<8x256xf32>,
    %44 = arith.select %22, %38, %32 : vector<8x256xi1>, vector<8x256xf32>
    %c8 = arith.constant 8 : index
    %c0_25 = arith.constant 0 : index
    %45 = vector.load %arg6[%c8, %c0_25] : memref<72x256xf32, #tpu.memory_space<vmem>>, vector<8x256xf32>
    tpu.vector_store %arg6[%c8, %c0_25], %44 {strides = array<i32>} : memref<72x256xf32, #tpu.memory_space<vmem>>, vector<8x256xf32>,
    %46 = arith.select %20, %31, %33 : vector<8x256xi1>, vector<8x256xf32>
    %47 = arith.select %20, %37, %39 : vector<8x256xi1>, vector<8x256xf32>
    %48 = arith.select %22, %47, %46 : vector<8x256xi1>, vector<8x256xf32>
    %c16_26 = arith.constant 16 : index
    %c0_27 = arith.constant 0 : index
    %49 = vector.load %arg6[%c16_26, %c0_27] : memref<72x256xf32, #tpu.memory_space<vmem>>, vector<8x256xf32>
    tpu.vector_store %arg6[%c16_26, %c0_27], %48 {strides = array<i32>} : memref<72x256xf32, #tpu.memory_space<vmem>>, vector<8x256xf32>,
    %50 = arith.select %18, %36, %34 : vector<8x256xi1>, vector<8x256xf32>
    %c24 = arith.constant 24 : index
    %c0_28 = arith.constant 0 : index
    %51 = vector.load %arg6[%c24, %c0_28] : memref<72x256xf32, #tpu.memory_space<vmem>>, vector<8x256xf32>
    tpu.vector_store %arg6[%c24, %c0_28], %50 {strides = array<i32>} : memref<72x256xf32, #tpu.memory_space<vmem>>, vector<8x256xf32>,
    %c32_29 = arith.constant 32 : index
    %c0_30 = arith.constant 0 : index
    %52 = vector.load %arg6[%c32_29, %c0_30] : memref<72x256xf32, #tpu.memory_space<vmem>>, vector<8x256xf32>
    tpu.vector_store %arg6[%c32_29, %c0_30], %35 {strides = array<i32>} : memref<72x256xf32, #tpu.memory_space<vmem>>, vector<8x256xf32>,
    %53 = arith.select %20, %34, %36 : vector<8x256xi1>, vector<8x256xf32>
    %c40 = arith.constant 40 : index
    %c0_31 = arith.constant 0 : index
    %54 = vector.load %arg6[%c40, %c0_31] : memref<72x256xf32, #tpu.memory_space<vmem>>, vector<8x256xf32>
    tpu.vector_store %arg6[%c40, %c0_31], %53 {strides = array<i32>} : memref<72x256xf32, #tpu.memory_space<vmem>>, vector<8x256xf32>,
    %55 = arith.select %18, %39, %37 : vector<8x256xi1>, vector<8x256xf32>
    %56 = arith.select %18, %33, %31 : vector<8x256xi1>, vector<8x256xf32>
    %57 = arith.select %24, %56, %55 : vector<8x256xi1>, vector<8x256xf32>
    %c48 = arith.constant 48 : index
    %c0_32 = arith.constant 0 : index
    %58 = vector.load %arg6[%c48, %c0_32] : memref<72x256xf32, #tpu.memory_space<vmem>>, vector<8x256xf32>
    tpu.vector_store %arg6[%c48, %c0_32], %57 {strides = array<i32>} : memref<72x256xf32, #tpu.memory_space<vmem>>, vector<8x256xf32>,
    %59 = arith.select %24, %32, %38 : vector<8x256xi1>, vector<8x256xf32>
    %c56 = arith.constant 56 : index
    %c0_33 = arith.constant 0 : index
    %60 = vector.load %arg6[%c56, %c0_33] : memref<72x256xf32, #tpu.memory_space<vmem>>, vector<8x256xf32>
    tpu.vector_store %arg6[%c56, %c0_33], %59 {strides = array<i32>} : memref<72x256xf32, #tpu.memory_space<vmem>>, vector<8x256xf32>,
    %61 = arith.select %20, %37, %39 : vector<8x256xi1>, vector<8x256xf32>
    %62 = arith.select %20, %31, %33 : vector<8x256xi1>, vector<8x256xf32>
    %63 = arith.select %24, %62, %61 : vector<8x256xi1>, vector<8x256xf32>
    %c64 = arith.constant 64 : index
    %c0_34 = arith.constant 0 : index
    %64 = vector.load %arg6[%c64, %c0_34] : memref<72x256xf32, #tpu.memory_space<vmem>>, vector<8x256xf32>
    tpu.vector_store %arg6[%c64, %c0_34], %63 {strides = array<i32>} : memref<72x256xf32, #tpu.memory_space<vmem>>, vector<8x256xf32>,
    %c0_35 = arith.constant 0 : index
    %c0_36 = arith.constant 0 : index
    %65 = vector.load %arg6[%c0_35, %c0_36] : memref<72x256xf32, #tpu.memory_space<vmem>>, vector<72x256xf32>
    %cst_37 = arith.constant dense<0.000000e+00> : vector<8x256xf32>
    %66 = tpu.matmul %29, %65, %cst_37 {dimension_numbers = #tpu.dot_dimension_numbers<[1], [0], [0], [1], [0, 0, 1, 1], [], []>} : vector<8x72xf32>, vector<72x256xf32>, vector<8x256xf32> -> vector<8x256xf32>
    %cst_38 = arith.constant dense<0.000000e+00> : vector<8xf32>
    %67 = vector.multi_reduction <add>, %66, %cst_38 [1] : vector<8x256xf32> to vector<8xf32>
    %68 = vector.shape_cast %67 : vector<8xf32> to vector<8x1xf32>
    %cst_39 = arith.constant 3.906250e-03 : f32
    %69 = vector.broadcast %cst_39 : f32 to vector<8x1xf32>
    %70 = arith.mulf %68, %69 : vector<8x1xf32>
    %71 = arith.mulf %66, %66 : vector<8x256xf32>
    %cst_40 = arith.constant dense<0.000000e+00> : vector<8xf32>
    %72 = vector.multi_reduction <add>, %71, %cst_40 [1] : vector<8x256xf32> to vector<8xf32>
    %73 = vector.shape_cast %72 : vector<8xf32> to vector<8x1xf32>
    %cst_41 = arith.constant 3.906250e-03 : f32
    %74 = vector.broadcast %cst_41 : f32 to vector<8x1xf32>
    %75 = arith.mulf %73, %74 : vector<8x1xf32>
    %76 = arith.mulf %70, %70 : vector<8x1xf32>
    %77 = arith.subf %75, %76 : vector<8x1xf32>
    %78 = vector.broadcast %70 : vector<8x1xf32> to vector<8x256xf32>
    %79 = arith.subf %66, %78 : vector<8x256xf32>
    %cst_42 = arith.constant 9.99999974E-6 : f32
    %80 = vector.broadcast %cst_42 : f32 to vector<8x1xf32>
    %81 = arith.addf %77, %80 : vector<8x1xf32>
    %82 = math.rsqrt %81 : vector<8x1xf32>
    %83 = vector.broadcast %82 : vector<8x1xf32> to vector<8x256xf32>
    %84 = arith.mulf %79, %83 : vector<8x256xf32>
    %cst_43 = arith.constant 0.000000e+00 : f32
    %85 = vector.broadcast %cst_43 : f32 to vector<8x256xf32>
    %86 = arith.maximumf %84, %85 : vector<8x256xf32>
    %c0_44 = arith.constant 0 : index
    %c0_45 = arith.constant 0 : index
    %87 = vector.load %arg3[%c0_44, %c0_45] : memref<8x72xf32, #tpu.memory_space<vmem>>, vector<8x72xf32>
    %c0_46 = arith.constant 0 : index
    %c17_47 = arith.constant 17 : index
    %88 = vector.load %arg5[%c0_46, %c17_47] : memref<8x290xf32, #tpu.memory_space<vmem>>, vector<8x256xf32>
    tpu.vector_store %arg5[%c0_46, %c17_47], %86 {strides = array<i32>} : memref<8x290xf32, #tpu.memory_space<vmem>>, vector<8x256xf32>,
    %c0_48 = arith.constant 0 : index
    %c0_49 = arith.constant 0 : index
    %89 = vector.load %arg5[%c0_48, %c0_49] : memref<8x290xf32, #tpu.memory_space<vmem>>, vector<8x256xf32>
    %c0_50 = arith.constant 0 : index
    %c1_51 = arith.constant 1 : index
    %90 = vector.load %arg5[%c0_50, %c1_51] : memref<8x290xf32, #tpu.memory_space<vmem>>, vector<8x256xf32>
    %c0_52 = arith.constant 0 : index
    %c2_53 = arith.constant 2 : index
    %91 = vector.load %arg5[%c0_52, %c2_53] : memref<8x290xf32, #tpu.memory_space<vmem>>, vector<8x256xf32>
    %c0_54 = arith.constant 0 : index
    %c16_55 = arith.constant 16 : index
    %92 = vector.load %arg5[%c0_54, %c16_55] : memref<8x290xf32, #tpu.memory_space<vmem>>, vector<8x256xf32>
    %c0_56 = arith.constant 0 : index
    %c17_57 = arith.constant 17 : index
    %93 = vector.load %arg5[%c0_56, %c17_57] : memref<8x290xf32, #tpu.memory_space<vmem>>, vector<8x256xf32>
    %c0_58 = arith.constant 0 : index
    %c18_59 = arith.constant 18 : index
    %94 = vector.load %arg5[%c0_58, %c18_59] : memref<8x290xf32, #tpu.memory_space<vmem>>, vector<8x256xf32>
    %c0_60 = arith.constant 0 : index
    %c32_61 = arith.constant 32 : index
    %95 = vector.load %arg5[%c0_60, %c32_61] : memref<8x290xf32, #tpu.memory_space<vmem>>, vector<8x256xf32>
    %c0_62 = arith.constant 0 : index
    %c33_63 = arith.constant 33 : index
    %96 = vector.load %arg5[%c0_62, %c33_63] : memref<8x290xf32, #tpu.memory_space<vmem>>, vector<8x256xf32>
    %c0_64 = arith.constant 0 : index
    %c34_65 = arith.constant 34 : index
    %97 = vector.load %arg5[%c0_64, %c34_65] : memref<8x290xf32, #tpu.memory_space<vmem>>, vector<8x256xf32>
    %98 = arith.select %18, %91, %89 : vector<8x256xi1>, vector<8x256xf32>
    %99 = arith.select %18, %97, %95 : vector<8x256xi1>, vector<8x256xf32>
    %100 = arith.select %22, %99, %98 : vector<8x256xi1>, vector<8x256xf32>
    %c0_66 = arith.constant 0 : index
    %c0_67 = arith.constant 0 : index
    %101 = vector.load %arg6[%c0_66, %c0_67] : memref<72x256xf32, #tpu.memory_space<vmem>>, vector<8x256xf32>
    tpu.vector_store %arg6[%c0_66, %c0_67], %100 {strides = array<i32>} : memref<72x256xf32, #tpu.memory_space<vmem>>, vector<8x256xf32>,
    %102 = arith.select %22, %96, %90 : vector<8x256xi1>, vector<8x256xf32>
    %c8_68 = arith.constant 8 : index
    %c0_69 = arith.constant 0 : index
    %103 = vector.load %arg6[%c8_68, %c0_69] : memref<72x256xf32, #tpu.memory_space<vmem>>, vector<8x256xf32>
    tpu.vector_store %arg6[%c8_68, %c0_69], %102 {strides = array<i32>} : memref<72x256xf32, #tpu.memory_space<vmem>>, vector<8x256xf32>,
    %104 = arith.select %20, %89, %91 : vector<8x256xi1>, vector<8x256xf32>
    %105 = arith.select %20, %95, %97 : vector<8x256xi1>, vector<8x256xf32>
    %106 = arith.select %22, %105, %104 : vector<8x256xi1>, vector<8x256xf32>
    %c16_70 = arith.constant 16 : index
    %c0_71 = arith.constant 0 : index
    %107 = vector.load %arg6[%c16_70, %c0_71] : memref<72x256xf32, #tpu.memory_space<vmem>>, vector<8x256xf32>
    tpu.vector_store %arg6[%c16_70, %c0_71], %106 {strides = array<i32>} : memref<72x256xf32, #tpu.memory_space<vmem>>, vector<8x256xf32>,
    %108 = arith.select %18, %94, %92 : vector<8x256xi1>, vector<8x256xf32>
    %c24_72 = arith.constant 24 : index
    %c0_73 = arith.constant 0 : index
    %109 = vector.load %arg6[%c24_72, %c0_73] : memref<72x256xf32, #tpu.memory_space<vmem>>, vector<8x256xf32>
    tpu.vector_store %arg6[%c24_72, %c0_73], %108 {strides = array<i32>} : memref<72x256xf32, #tpu.memory_space<vmem>>, vector<8x256xf32>,
    %c32_74 = arith.constant 32 : index
    %c0_75 = arith.constant 0 : index
    %110 = vector.load %arg6[%c32_74, %c0_75] : memref<72x256xf32, #tpu.memory_space<vmem>>, vector<8x256xf32>
    tpu.vector_store %arg6[%c32_74, %c0_75], %93 {strides = array<i32>} : memref<72x256xf32, #tpu.memory_space<vmem>>, vector<8x256xf32>,
    %111 = arith.select %20, %92, %94 : vector<8x256xi1>, vector<8x256xf32>
    %c40_76 = arith.constant 40 : index
    %c0_77 = arith.constant 0 : index
    %112 = vector.load %arg6[%c40_76, %c0_77] : memref<72x256xf32, #tpu.memory_space<vmem>>, vector<8x256xf32>
    tpu.vector_store %arg6[%c40_76, %c0_77], %111 {strides = array<i32>} : memref<72x256xf32, #tpu.memory_space<vmem>>, vector<8x256xf32>,
    %113 = arith.select %18, %97, %95 : vector<8x256xi1>, vector<8x256xf32>
    %114 = arith.select %18, %91, %89 : vector<8x256xi1>, vector<8x256xf32>
    %115 = arith.select %24, %114, %113 : vector<8x256xi1>, vector<8x256xf32>
    %c48_78 = arith.constant 48 : index
    %c0_79 = arith.constant 0 : index
    %116 = vector.load %arg6[%c48_78, %c0_79] : memref<72x256xf32, #tpu.memory_space<vmem>>, vector<8x256xf32>
    tpu.vector_store %arg6[%c48_78, %c0_79], %115 {strides = array<i32>} : memref<72x256xf32, #tpu.memory_space<vmem>>, vector<8x256xf32>,
    %117 = arith.select %24, %90, %96 : vector<8x256xi1>, vector<8x256xf32>
    %c56_80 = arith.constant 56 : index
    %c0_81 = arith.constant 0 : index
    %118 = vector.load %arg6[%c56_80, %c0_81] : memref<72x256xf32, #tpu.memory_space<vmem>>, vector<8x256xf32>
    tpu.vector_store %arg6[%c56_80, %c0_81], %117 {strides = array<i32>} : memref<72x256xf32, #tpu.memory_space<vmem>>, vector<8x256xf32>,
    %119 = arith.select %20, %95, %97 : vector<8x256xi1>, vector<8x256xf32>
    %120 = arith.select %20, %89, %91 : vector<8x256xi1>, vector<8x256xf32>
    %121 = arith.select %24, %120, %119 : vector<8x256xi1>, vector<8x256xf32>
    %c64_82 = arith.constant 64 : index
    %c0_83 = arith.constant 0 : index
    %122 = vector.load %arg6[%c64_82, %c0_83] : memref<72x256xf32, #tpu.memory_space<vmem>>, vector<8x256xf32>
    tpu.vector_store %arg6[%c64_82, %c0_83], %121 {strides = array<i32>} : memref<72x256xf32, #tpu.memory_space<vmem>>, vector<8x256xf32>,
    %c0_84 = arith.constant 0 : index
    %c0_85 = arith.constant 0 : index
    %123 = vector.load %arg6[%c0_84, %c0_85] : memref<72x256xf32, #tpu.memory_space<vmem>>, vector<72x256xf32>
    %cst_86 = arith.constant dense<0.000000e+00> : vector<8x256xf32>
    %124 = tpu.matmul %87, %123, %cst_86 {dimension_numbers = #tpu.dot_dimension_numbers<[1], [0], [0], [1], [0, 0, 1, 1], [], []>} : vector<8x72xf32>, vector<72x256xf32>, vector<8x256xf32> -> vector<8x256xf32>
    %cst_87 = arith.constant dense<0.000000e+00> : vector<8xf32>
    %125 = vector.multi_reduction <add>, %124, %cst_87 [1] : vector<8x256xf32> to vector<8xf32>
    %126 = vector.shape_cast %125 : vector<8xf32> to vector<8x1xf32>
    %cst_88 = arith.constant 3.906250e-03 : f32
    %127 = vector.broadcast %cst_88 : f32 to vector<8x1xf32>
    %128 = arith.mulf %126, %127 : vector<8x1xf32>
    %129 = arith.mulf %124, %124 : vector<8x256xf32>
    %cst_89 = arith.constant dense<0.000000e+00> : vector<8xf32>
    %130 = vector.multi_reduction <add>, %129, %cst_89 [1] : vector<8x256xf32> to vector<8xf32>
    %131 = vector.shape_cast %130 : vector<8xf32> to vector<8x1xf32>
    %cst_90 = arith.constant 3.906250e-03 : f32
    %132 = vector.broadcast %cst_90 : f32 to vector<8x1xf32>
    %133 = arith.mulf %131, %132 : vector<8x1xf32>
    %134 = arith.mulf %128, %128 : vector<8x1xf32>
    %135 = arith.subf %133, %134 : vector<8x1xf32>
    %136 = vector.broadcast %128 : vector<8x1xf32> to vector<8x256xf32>
    %137 = arith.subf %124, %136 : vector<8x256xf32>
    %cst_91 = arith.constant 9.99999974E-6 : f32
    %138 = vector.broadcast %cst_91 : f32 to vector<8x1xf32>
    %139 = arith.addf %135, %138 : vector<8x1xf32>
    %140 = math.rsqrt %139 : vector<8x1xf32>
    %141 = vector.broadcast %140 : vector<8x1xf32> to vector<8x256xf32>
    %142 = arith.mulf %137, %141 : vector<8x256xf32>
    %143 = arith.addf %28, %142 : vector<8x256xf32>
    %c0_92 = arith.constant 0 : index
    %c0_93 = arith.constant 0 : index
    %c0_94 = arith.constant 0 : index
    %144 = vector.load %arg4[%c0_92, %c0_93, %c0_94] : memref<1x8x256xf32, #tpu.memory_space<vmem>>, vector<1x8x256xf32>
    %145 = vector.shape_cast %144 : vector<1x8x256xf32> to vector<8x256xf32>
    %146 = vector.shape_cast %143 : vector<8x256xf32> to vector<1x8x256xf32>
    tpu.vector_store %arg4[%c0_92, %c0_93, %c0_94], %146 {strides = array<i32>} : memref<1x8x256xf32, #tpu.memory_space<vmem>>, vector<1x8x256xf32>,
    return
  }
  func.func @transform_0(%arg0: i32) -> (i32, i32, i32) {
    %c0_i32 = arith.constant 0 : i32
    %c0_i32_0 = arith.constant 0 : i32
    %c0_i32_1 = arith.constant 0 : i32
    return %arg0, %c0_i32, %c0_i32_0 : i32, i32, i32
  }
  func.func @transform_1(%arg0: i32) -> (i32, i32) {
    %c0_i32 = arith.constant 0 : i32
    %c0_i32_0 = arith.constant 0 : i32
    %c0_i32_1 = arith.constant 0 : i32
    return %c0_i32, %c0_i32_0 : i32, i32
  }
  func.func @transform_2(%arg0: i32) -> (i32, i32) {
    %c0_i32 = arith.constant 0 : i32
    %c0_i32_0 = arith.constant 0 : i32
    %c0_i32_1 = arith.constant 0 : i32
    return %c0_i32, %c0_i32_0 : i32, i32
  }
  func.func @transform_3(%arg0: i32) -> (i32, i32, i32) {
    %c0_i32 = arith.constant 0 : i32
    %c0_i32_0 = arith.constant 0 : i32
    %c0_i32_1 = arith.constant 0 : i32
    return %arg0, %c0_i32, %c0_i32_0 : i32, i32, i32
  }
}

</mosaic_0001>

<llo_original>
// kernel: resnet_block_forward.1
$region0: #{resnet_block_forward.1}
  #allocation0 [shape = 'u32[]', space=smem, size = 0x4, offset = 0x4, fixed_abs, tag = 'smem constant byte address 0x4 - core index']
  #allocation1 [shape = 'u32[144,128]{1,0:T(1,128)}', space=vmem, size = 0x12000, scoped, tag = 'internal scratch']
  #allocation2 [shape = 'f32[8,290]{1,0:T(8,128)}', space=vmem, size = 0x3000, scoped, tag = 'scratch operand']
  #allocation3 [shape = 'f32[72,256]{1,0:T(8,128)}', space=vmem, size = 0x12000, scoped, tag = 'scratch operand']
  %s0 = inlined_call_operand.vmem [shape: f32[2,8,256], index: 0, kind: input, shape index: {}]
  %s1 = inlined_call_operand.vmem [shape: f32[8,72], index: 1, kind: input, shape index: {}]
  %s2 = inlined_call_operand.vmem [shape: f32[8,72], index: 2, kind: input, shape index: {}]
  %s3 = inlined_call_operand.vmem [shape: f32[2,8,256], index: 3, kind: output, shape index: {}]
  %s4 = sld [smem:[#allocation0]]
  $region45: #{resnet_block_forward.1} parent=0
    _
  %s6 = ssub.s32 1, %s4
  %s7 = scalar_select 0, %s6, %s4
  loop: start=0, step=1, limit=4
  $region2: #{resnet_block_forward.1} parent=0 // loop_pre_header
    _
  $region3: #{resnet_block_forward.1} parent=0 // loop_header
    %s9 = sphi 0, %s13
    %p10 = scmp.ge.s32.totalorder %s9, 4
    %s19 = sphi 0, %s21
    %s22 = sphi 0, %s19
    %s23 = sphi 0, %s22
    %s39 = sphi 0, %s23
    %s43 = sphi 0, %s43
    %s45 = sphi 0, %s43
    %s46 = sphi 0, %s45
    %s60 = sphi 0, %s46
    %s64 = sphi 0, %s64
    %s66 = sphi 0, %s64
    %s67 = sphi 0, %s66
    %s81 = sphi 0, %s67
    %s87 = sphi 0, %s89
    %s90 = sphi 0, %s87
    %s91 = sphi 0, %s90
    %s107 = sphi 0, %s91
  $region4: #{resnet_block_forward.1} parent=0 // loop_header_branch
    %12 = sbr.rel (%p10) target = $region8
  $region5: #{resnet_block_forward.1} parent=0 // loop_body
    %s14 = ssub.s32 %s9, 1
    %s15 = ssub.s32 %s9, 2
    %s16 = sadd.s32 %s9, 1
    %s17 = ssub.s32 %s9, %s16
    %p18 = scmp.eq.s32.totalorder %s17, 0
    %s20 = sadd.s32 %s19, 1
    %s21 = scalar_select %p18, %s19, %s20
    %p24 = pneg %p18
    %p25 = scmp.eq.s32.totalorder %s9, 1
    %p26 = por %p24, %p25
    %p27 = scmp.ne.s32.totalorder %s19, %s22
    %p28 = scmp.eq.s32.totalorder %s9, 0
    %p29 = por %p27, %p28
    %p30 = scmp.ne.s32.totalorder %s19, %s22
    %p31 = scmp.eq.s32.totalorder %s14, 1
    %p32 = por %p30, %p31
    %p33 = scmp.ne.s32.totalorder %s22, %s23
    %p34 = scmp.eq.s32.totalorder %s14, 0
    %p35 = por %p33, %p34
    %p36 = scmp.ne.s32.totalorder %s22, %s23
    %p37 = scmp.eq.s32.totalorder %s15, 1
    %p38 = por %p36, %p37
    %p40 = scmp.ne.s32.totalorder %s23, %s39
    %p41 = scmp.eq.s32.totalorder %s15, 0
    %p42 = por %p40, %p41
    %s44 = sadd.s32 %s43, 1
    %p47 = scmp.eq.s32.totalorder %s9, 1
    %p48 = scmp.ne.s32.totalorder %s43, %s45
    %p49 = scmp.eq.s32.totalorder %s9, 0
    %p50 = por %p48, %p49
    %p51 = scmp.ne.s32.totalorder %s43, %s45
    %p52 = scmp.eq.s32.totalorder %s14, 1
    %p53 = por %p51, %p52
    %p54 = scmp.ne.s32.totalorder %s45, %s46
    %p55 = scmp.eq.s32.totalorder %s14, 0
    %p56 = por %p54, %p55
    %p57 = scmp.ne.s32.totalorder %s45, %s46
    %p58 = scmp.eq.s32.totalorder %s15, 1
    %p59 = por %p57, %p58
    %p61 = scmp.ne.s32.totalorder %s46, %s60
    %p62 = scmp.eq.s32.totalorder %s15, 0
    %p63 = por %p61, %p62
    %s65 = sadd.s32 %s64, 1
    %p68 = scmp.eq.s32.totalorder %s9, 1
    %p69 = scmp.ne.s32.totalorder %s64, %s66
    %p70 = scmp.eq.s32.totalorder %s9, 0
    %p71 = por %p69, %p70
    %p72 = scmp.ne.s32.totalorder %s64, %s66
    %p73 = scmp.eq.s32.totalorder %s14, 1
    %p74 = por %p72, %p73
    %p75 = scmp.ne.s32.totalorder %s66, %s67
    %p76 = scmp.eq.s32.totalorder %s14, 0
    %p77 = por %p75, %p76
    %p78 = scmp.ne.s32.totalorder %s66, %s67
    %p79 = scmp.eq.s32.totalorder %s15, 1
    %p80 = por %p78, %p79
    %p82 = scmp.ne.s32.totalorder %s67, %s81
    %p83 = scmp.eq.s32.totalorder %s15, 0
    %p84 = por %p82, %p83
    %s85 = ssub.s32 %s9, %s16
    %p86 = scmp.eq.s32.totalorder %s85, 0
    %s88 = sadd.s32 %s87, 1
    %s89 = scalar_select %p86, %s87, %s88
    %p92 = pneg %p86
    %p93 = scmp.eq.s32.totalorder %s9, 1
    %p94 = por %p92, %p93
    %p95 = scmp.ne.s32.totalorder %s87, %s90
    %p96 = scmp.eq.s32.totalorder %s9, 0
    %p97 = por %p95, %p96
    %p98 = scmp.ne.s32.totalorder %s87, %s90
    %p99 = scmp.eq.s32.totalorder %s14, 1
    %p100 = por %p98, %p99
    %p101 = scmp.ne.s32.totalorder %s90, %s91
    %p102 = scmp.eq.s32.totalorder %s14, 0
    %p103 = por %p101, %p102
    %p104 = scmp.ne.s32.totalorder %s90, %s91
    %p105 = scmp.eq.s32.totalorder %s15, 1
    %p106 = por %p104, %p105
    %p108 = scmp.ne.s32.totalorder %s91, %s107
    %p109 = scmp.eq.s32.totalorder %s15, 0
    %p110 = por %p108, %p109
    %p111 = scmp.le.s32.totalorder 1, %s9
    %p112 = scmp.lt.s32.totalorder %s9, 3
    %p113 = pnand %p111, %p112
    %p114 = pneg %p113
    // Predicated region
    $region9: #{resnet_block_forward.1} parent=5 // pred_check
      _
    $region10: #{resnet_block_forward.1} parent=5 // pred_check_branch
      %116 = sbr.rel (%p113) target = $region12
    $region11: #{resnet_block_forward.1} parent=5 // pred_region
      %s117 = ssub.s32 %s9, 1
      // Predicated region
      $region13: #{resnet_block_forward.1} parent=11 // pred_check
        %p118 = pneg %p56
      $region14: #{resnet_block_forward.1} parent=11 // pred_check_branch
        %120 = sbr.rel (%p118) target = $region16
      $region15: #{resnet_block_forward.1} parent=11 // pred_region
        _
      $region16: #{resnet_block_forward.1} parent=11 // pred_fallthru
        _
      // Predicated region
      $region17: #{resnet_block_forward.1} parent=11 // pred_check
        %p121 = pneg %p77
      $region18: #{resnet_block_forward.1} parent=11 // pred_check_branch
        %123 = sbr.rel (%p121) target = $region20
      $region19: #{resnet_block_forward.1} parent=11 // pred_region
        _
      $region20: #{resnet_block_forward.1} parent=11 // pred_fallthru
        _
    $region12: #{resnet_block_forward.1} parent=5 // pred_fallthru
      _
    %p124 = scmp.lt.s32.totalorder %s9, 2
    // Predicated region
    $region21: #{resnet_block_forward.1} parent=5 // pred_check
      %p125 = pneg %p124
    $region22: #{resnet_block_forward.1} parent=5 // pred_check_branch
      %127 = sbr.rel (%p125) target = $region24
    $region23: #{resnet_block_forward.1} parent=5 // pred_region
      // Predicated region
      $region25: #{resnet_block_forward.1} parent=23 // pred_check
        %p128 = pneg %p29
      $region26: #{resnet_block_forward.1} parent=23 // pred_check_branch
        %130 = sbr.rel (%p128) target = $region28
      $region27: #{resnet_block_forward.1} parent=23 // pred_region
        %p131 = scmp.lt.s32.totalorder %s9, 1
        %s132 = scalar_select %p131, %s9, 1
        %s133 = smul.addr %s132, 2
        %s134 = smul.addr %s133, 8
        %s135 = scalar_lea.vmem %s0, %s134
      $region28: #{resnet_block_forward.1} parent=23 // pred_fallthru
        _
    $region24: #{resnet_block_forward.1} parent=5 // pred_fallthru
      _
    %p136 = scmp.le.s32.totalorder 1, %s9
    %p137 = scmp.lt.s32.totalorder %s9, 3
    %p138 = pnand %p136, %p137
    %p139 = pneg %p138
    // Predicated region
    $region29: #{resnet_block_forward.1} parent=5 // pred_check
      _
    $region30: #{resnet_block_forward.1} parent=5 // pred_check_branch
      %141 = sbr.rel (%p138) target = $region32
    $region31: #{resnet_block_forward.1} parent=5 // pred_region
      %s142 = ssub.s32 %s9, 1
      %p143 = scmp.lt.s32.totalorder %s14, 1
      %s144 = scalar_select %p143, %s14, 1
      %s145 = smul.addr %s144, 2
      %s146 = smul.addr %s145, 8
      %s147 = scalar_lea.vmem %s0, %s146
      %p148 = pneg %p35
      %p149 = pneg %p32
      %p150 = pneg %p56
      %p151 = pneg %p53
      %p152 = pneg %p77
      %p153 = pneg %p74
      %p154 = pneg %p103
      %p155 = pneg %p100
      %p156 = scmp.lt.s32.totalorder %s14, 1
      %s157 = scalar_select %p156, %s14, 1
      %s158 = smul.addr %s157, 2
      %s159 = smul.addr %s158, 8
      %s160 = scalar_lea.vmem %s3, %s159
      %p161 = scmp.lt.s32.totalorder %s14, 1
      %s162 = scalar_select %p161, %s14, 1
      %s163 = smul.addr %s162, 2
      %s164 = smul.addr %s163, 8
      %s165 = scalar_lea.vmem %s0, %s164
      %p166 = scmp.lt.s32.totalorder %s14, 1
      %s167 = scalar_select %p166, %s14, 1
      %s168 = smul.addr %s167, 2
      %s169 = smul.addr %s168, 8
      %s170 = scalar_lea.vmem %s3, %s169
      %v171 = vlaneseq
      %v172 = vand.u32 %v171, 127
      %v173 = vadd.s32 %v172, 128
      %vm174 = vcmp.lt.s32.totalorder %v172, 0
      %v175 = vsub.s32 0, %v172
      %v176 = vsel %vm174, %v175, %v172
      %v177 = vshrl.u32 %v176, 4
      %v178 = vand.u32 %v176, 15
      %v179 = vsub.s32 0, %v178
      %v180 = vsel %vm174, %v179, %v178
      %vm181 = vcmp.lt.s32.totalorder %v173, 0
      %v182 = vsub.s32 0, %v173
      %v183 = vsel %vm181, %v182, %v173
      %v184 = vshrl.u32 %v183, 4
      %v185 = vand.u32 %v183, 15
      %v186 = vsub.s32 0, %v185
      %v187 = vsel %vm181, %v186, %v185
      %vm188 = vcmp.ne.s32.totalorder %v180, 0
      %vm189 = vcmp.ne.s32.totalorder %v187, 0
      %vm190 = vcmp.lt.s32.totalorder %v180, 0
      %vm191 = vcmp.lt.s32.totalorder %v187, 0
      %vm192 = vmand %vm190, %vm188
      %vm193 = vmand %vm191, %vm189
      %v194 = vadd.s32 %v180, 16
      %v195 = vadd.s32 %v187, 16
      %v196 = vsel %vm192, %v194, %v180
      %v197 = vsel %vm193, %v195, %v187
      %vm198 = vcmp.eq.s32.totalorder %v196, 0
      %vm199 = vcmp.eq.s32.totalorder %v197, 0
      %vm200 = vcmp.eq.s32.totalorder %v196, 15
      %vm201 = vcmp.eq.s32.totalorder %v197, 15
      %vm202 = vcmp.lt.s32.totalorder %v172, 16
      %vm203 = vcmp.lt.s32.totalorder %v173, 16
      %vm204 = vcmp.ge.s32.totalorder %v172, 240
      %vm205 = vcmp.ge.s32.totalorder %v173, 240
      %206 = vst [vmem:[#allocation2] sm:$0xff] 0.0
      %207 = vst [vmem:[#allocation2 + $0x8] sm:$0xff] 0.0
      %vm208 = vcmask 277504
      %209 = vst.msk [vmem:[#allocation2 + $0x10] sm:$0xff] %vm208, 0.0
      %v210 = vld [vmem:[%s165] sm:$0xff]
      %v211 = vld [vmem:[%s165 + $0x8] sm:$0xff]
      %v212 = vld [vmem:[%s1] sm:$0xff]
      %215 = vrot.lane.b32.xlu0 %v210, 17
      %v216 = vpop.permute.xlu0 %215
      %217 = vrot.lane.b32.xlu0 %v211, 17
      %v218 = vpop.permute.xlu0 %217
      %vm219 = vcmask 138240
      %v220 = vsel %vm219, %v216, %v218
      %vm224 = vcmask 1047688
      %225 = vst.msk [vmem:[#allocation2] sm:$0xff] %vm224, %v216
      %226 = vst [vmem:[#allocation2 + $0x8] sm:$0xff] %v220
      %227 = vst.msk [vmem:[#allocation2 + $0x10] sm:$0xff] %vm219, %v218
      %v228 = vld [vmem:[#allocation2] sm:$0xff]
      %v229 = vld [vmem:[#allocation2 + $0x8] sm:$0xff]
      %v230 = vld [vmem:[#allocation2 + $0x10] sm:$0xff]
      %234 = vrot.lane.b32.xlu0 %v228, 126
      %v235 = vpop.permute.xlu0 %234
      %236 = vrot.lane.b32.xlu0 %v229, 126
      %v237 = vpop.permute.xlu0 %236
      %238 = vrot.lane.b32.xlu0 %v230, 126
      %v239 = vpop.permute.xlu0 %238
      %vm240 = vcmask 1031168
      %v241 = vsel %vm240, %v235, %v237
      %v242 = vsel %vm240, %v237, %v239
      %v245 = vsel %vm198, %v241, %v228
      %v246 = vsel %vm199, %v242, %v229
      %247 = vrot.lane.b32.xlu0 %v228, 94
      %v248 = vpop.permute.xlu0 %247
      %249 = vrot.lane.b32.xlu0 %v229, 94
      %v250 = vpop.permute.xlu0 %249
      %251 = vrot.lane.b32.xlu0 %v230, 94
      %v252 = vpop.permute.xlu0 %251
      %vm253 = vcmask 769024
      %v254 = vsel %vm253, %v248, %v250
      %v255 = vsel %vm253, %v250, %v252
      %258 = vrot.lane.b32.xlu0 %v228, 96
      %v259 = vpop.permute.xlu0 %258
      %260 = vrot.lane.b32.xlu0 %v229, 96
      %v261 = vpop.permute.xlu0 %260
      %262 = vrot.lane.b32.xlu0 %v230, 96
      %v263 = vpop.permute.xlu0 %262
      %vm264 = vcmask 785408
      %v265 = vsel %vm264, %v259, %v261
      %v266 = vsel %vm264, %v261, %v263
      %v269 = vsel %vm198, %v254, %v265
      %v270 = vsel %vm199, %v255, %v266
      %v271 = vsel %vm202, %v269, %v245
      %v272 = vsel %vm203, %v270, %v246
      %273 = vst [vmem:[#allocation3] sm:$0xff] %v271
      %274 = vst [vmem:[#allocation3 + $0x8] sm:$0xff] %v272
      %275 = vrot.lane.b32.xlu0 %v228, 95
      %v276 = vpop.permute.xlu0 %275
      %277 = vrot.lane.b32.xlu0 %v229, 95
      %v278 = vpop.permute.xlu0 %277
      %279 = vrot.lane.b32.xlu0 %v230, 95
      %v280 = vpop.permute.xlu0 %279
      %vm281 = vcmask 777216
      %v282 = vsel %vm281, %v276, %v278
      %v283 = vsel %vm281, %v278, %v280
      %286 = vrot.lane.b32.xlu0 %v228, 127
      %v287 = vpop.permute.xlu0 %286
      %288 = vrot.lane.b32.xlu0 %v229, 127
      %v289 = vpop.permute.xlu0 %288
      %290 = vrot.lane.b32.xlu0 %v230, 127
      %v291 = vpop.permute.xlu0 %290
      %vm292 = vcmask 1039360
      %v293 = vsel %vm292, %v287, %v289
      %v294 = vsel %vm292, %v289, %v291
      %v297 = vsel %vm202, %v282, %v293
      %v298 = vsel %vm203, %v283, %v294
      %299 = vst [vmem:[#allocation3 + $0x10] sm:$0xff] %v297
      %300 = vst [vmem:[#allocation3 + $0x18] sm:$0xff] %v298
      %v301 = vsel %vm200, %v228, %v241
      %v302 = vsel %vm201, %v229, %v242
      %v303 = vsel %vm200, %v265, %v254
      %v304 = vsel %vm201, %v266, %v255
      %v305 = vsel %vm202, %v303, %v301
      %v306 = vsel %vm203, %v304, %v302
      %307 = vst [vmem:[#allocation3 + $0x20] sm:$0xff] %v305
      %308 = vst [vmem:[#allocation3 + $0x28] sm:$0xff] %v306
      %309 = vrot.lane.b32.xlu0 %v228, 110
      %v310 = vpop.permute.xlu0 %309
      %311 = vrot.lane.b32.xlu0 %v229, 110
      %v312 = vpop.permute.xlu0 %311
      %313 = vrot.lane.b32.xlu0 %v230, 110
      %v314 = vpop.permute.xlu0 %313
      %vm315 = vcmask 900096
      %v316 = vsel %vm315, %v310, %v312
      %v317 = vsel %vm315, %v312, %v314
      %320 = vrot.lane.b32.xlu0 %v228, 112
      %v321 = vpop.permute.xlu0 %320
      %322 = vrot.lane.b32.xlu0 %v229, 112
      %v323 = vpop.permute.xlu0 %322
      %324 = vrot.lane.b32.xlu0 %v230, 112
      %v325 = vpop.permute.xlu0 %324
      %vm326 = vcmask 916480
      %v327 = vsel %vm326, %v321, %v323
      %v328 = vsel %vm326, %v323, %v325
      %v331 = vsel %vm198, %v316, %v327
      %v332 = vsel %vm199, %v317, %v328
      %333 = vst [vmem:[#allocation3 + $0x30] sm:$0xff] %v331
      %334 = vst [vmem:[#allocation3 + $0x38] sm:$0xff] %v332
      %335 = vrot.lane.b32.xlu0 %v228, 111
      %v336 = vpop.permute.xlu0 %335
      %337 = vrot.lane.b32.xlu0 %v229, 111
      %v338 = vpop.permute.xlu0 %337
      %339 = vrot.lane.b32.xlu0 %v230, 111
      %v340 = vpop.permute.xlu0 %339
      %vm341 = vcmask 908288
      %v342 = vsel %vm341, %v336, %v338
      %v343 = vsel %vm341, %v338, %v340
      %346 = vst [vmem:[#allocation3 + $0x40] sm:$0xff] %v342
      %347 = vst [vmem:[#allocation3 + $0x48] sm:$0xff] %v343
      %v348 = vsel %vm200, %v327, %v316
      %v349 = vsel %vm201, %v328, %v317
      %350 = vst [vmem:[#allocation3 + $0x50] sm:$0xff] %v348
      %351 = vst [vmem:[#allocation3 + $0x58] sm:$0xff] %v349
      %v352 = vsel %vm204, %v245, %v269
      %v353 = vsel %vm205, %v246, %v270
      %354 = vst [vmem:[#allocation3 + $0x60] sm:$0xff] %v352
      %355 = vst [vmem:[#allocation3 + $0x68] sm:$0xff] %v353
      %v356 = vsel %vm204, %v293, %v282
      %v357 = vsel %vm205, %v294, %v283
      %358 = vst [vmem:[#allocation3 + $0x70] sm:$0xff] %v356
      %359 = vst [vmem:[#allocation3 + $0x78] sm:$0xff] %v357
      %v360 = vsel %vm204, %v301, %v303
      %v361 = vsel %vm205, %v302, %v304
      %362 = vst [vmem:[#allocation3 + $0x80] sm:$0xff] %v360
      %363 = vst [vmem:[#allocation3 + $0x88] sm:$0xff] %v361
      %v364 = vld [vmem:[#allocation3] sm:$0xff]
      %v365 = vld [vmem:[#allocation3 + $0x8] sm:$0xff]
      %v366 = vld [vmem:[#allocation3 + $0x10] sm:$0xff]
      %v367 = vld [vmem:[#allocation3 + $0x18] sm:$0xff]
      %v368 = vld [vmem:[#allocation3 + $0x20] sm:$0xff]
      %v369 = vld [vmem:[#allocation3 + $0x28] sm:$0xff]
      %v370 = vld [vmem:[#allocation3 + $0x30] sm:$0xff]
      %v371 = vld [vmem:[#allocation3 + $0x38] sm:$0xff]
      %v372 = vld [vmem:[#allocation3 + $0x40] sm:$0xff]
      %v373 = vld [vmem:[#allocation3 + $0x48] sm:$0xff]
      %v374 = vld [vmem:[#allocation3 + $0x50] sm:$0xff]
      %v375 = vld [vmem:[#allocation3 + $0x58] sm:$0xff]
      %v376 = vld [vmem:[#allocation3 + $0x60] sm:$0xff]
      %v377 = vld [vmem:[#allocation3 + $0x68] sm:$0xff]
      %v378 = vld [vmem:[#allocation3 + $0x70] sm:$0xff]
      %v379 = vld [vmem:[#allocation3 + $0x78] sm:$0xff]
      %v380 = vld [vmem:[#allocation3 + $0x80] sm:$0xff]
      %v381 = vld [vmem:[#allocation3 + $0x88] sm:$0xff]
      %vm382 = vcmask 588800
      %v384 = vsel %vm382, %v212, 0
      %386 = vmatprep.subr.mxu0 %v365
      %387 = vmatpush1.msra.mxu0 %v364
      %388 = vmatprep.subr.mxu0 %v367
      %389 = vmatpush1.msra.mxu0 %v366
      %390 = vmatprep.subr.mxu0 %v369
      %391 = vmatpush1.msra.mxu0 %v368
      %392 = vmatprep.subr.mxu0 %v371
      %393 = vmatpush1.msra.mxu0 %v370
      %394 = vmatprep.subr.mxu0 %v373
      %395 = vmatpush1.msra.mxu0 %v372
      %396 = vmatprep.subr.mxu0 %v375
      %397 = vmatpush1.msra.mxu0 %v374
      %398 = vmatprep.subr.mxu0 %v377
      %399 = vmatpush1.msra.mxu0 %v376
      %400 = vmatprep.subr.mxu0 %v379
      %401 = vmatpush1.msra.mxu0 %v378
      %402 = vmatprep.subr.mxu0 %v381
      %403 = vmatpush1.msra.mxu0 %v380
      %404 = vmatprep.subr.mxu0 0.0
      %405 = vmatpush1.msra.mxu0 0.0
      %406 = vmatprep.subr.mxu0 0.0
      %407 = vmatpush1.msra.mxu0 0.0
      %408 = vmatprep.subr.mxu0 0.0
      %409 = vmatpush1.msra.mxu0 0.0
      %410 = vmatprep.subr.mxu0 0.0
      %411 = vmatpush1.msra.mxu0 0.0
      %412 = vmatprep.subr.mxu0 0.0
      %413 = vmatpush1.msra.mxu0 0.0
      %414 = vmatprep.subr.mxu0 0.0
      %415 = vmatpush1.msra.mxu0 0.0
      %416 = vmatprep.subr.mxu0 0.0
      %417 = vmatpush1.msra.mxu0 0.0
      %418 = vmatprep.subr.mxu0 0.0
      %419 = vmatpush1.msra.mxu0 0.0
      %420 = vmatprep.subr.mxu0 0.0
      %421 = vmatpush1.msra.mxu0 0.0
      %422 = vmatprep.subr.mxu0 0.0
      %423 = vmatpush1.msra.mxu0 0.0
      %424 = vmatprep.subr.mxu0 0.0
      %425 = vmatpush1.msra.mxu0 0.0
      %426 = vmatprep.subr.mxu0 0.0
      %427 = vmatpush1.msra.mxu0 0.0
      %428 = vmatprep.subr.mxu0 0.0
      %429 = vmatpush1.msra.mxu0 0.0
      %430 = vmatprep.subr.mxu0 0.0
      %431 = vmatpush1.msra.mxu0 0.0
      %432 = vmatprep.subr.mxu0 0.0
      %433 = vmatpush1.msra.mxu0 0.0
      %434 = vmatprep.subr.mxu0 0.0
      %435 = vmatpush1.msra.mxu0 0.0
      %436 = vmatprep.subr.mxu0 0.0
      %437 = vmatpush1.msra.mxu0 0.0
      %438 = vmatprep.subr.mxu0 0.0
      %439 = vmatpush1.msra.mxu0 0.0
      %440 = vmatprep.subr.mxu0 0.0
      %441 = vmatpush1.msra.mxu0 0.0
      %442 = vmatprep.subr.mxu0 0.0
      %443 = vmatpush1.msra.mxu0 0.0
      %444 = vmatprep.subr.mxu0 0.0
      %445 = vmatpush1.msra.mxu0 0.0
      %446 = vmatprep.subr.mxu0 0.0
      %447 = vmatpush1.msra.mxu0 0.0
      %448 = vmatprep.subr.mxu0 0.0
      %449 = vmatpush1.msra.mxu0 0.0
      %450 = vmatprep.mubr.f32.mxu0 0.0
      %451 = vmatmul.mubr.f32.gmra.mrb[0].mxu0 %v384
      %v452 = vpop.f32.mrb[0].mxu0
      %v453 = vadd.f32 0.0, %v452
      %v454 = vpop.f32.mrb[0].mxu0
      %v455 = vadd.f32 0.0, %v454
      %456 = vdwg.mxu0
      %v457 = vadd.f32 %v453, %v455
      %458 = vadd.xlane.f32.xlu0 %v457
      %v459 = vpop.xlane.xlu0 %458
      %v460 = vmul.f32 %v459, 0.00390625
      %v461 = vmul.f32 %v453, %v453
      %v462 = vmul.f32 %v455, %v455
      %v463 = vadd.f32 %v461, %v462
      %464 = vadd.xlane.f32.xlu0 %v463
      %v465 = vpop.xlane.xlu0 %464
      %v466 = vmul.f32 %v465, 0.00390625
      %v467 = vmul.f32 %v460, %v460
      %v468 = vsub.f32 %v466, %v467
      %v469 = vsub.f32 %v453, %v460
      %v470 = vsub.f32 %v455, %v460
      %v471 = vadd.f32 %v468, 1e-05
      %v472 = vrsqrt.pop %v471
      %v473 = vmul.f32 %v469, %v472
      %v474 = vmul.f32 %v470, %v472
      %v475 = vmax.f32 %v473, 0.0
      %v476 = vmax.f32 %v474, 0.0
      %v477 = vld [vmem:[%s2] sm:$0xff]
      %480 = vrot.lane.b32.xlu0 %v475, 17
      %v481 = vpop.permute.xlu0 %480
      %482 = vrot.lane.b32.xlu0 %v476, 17
      %v483 = vpop.permute.xlu0 %482
      %v484 = vsel %vm219, %v481, %v483
      %488 = vst.msk [vmem:[#allocation2] sm:$0xff] %vm224, %v481
      %489 = vst [vmem:[#allocation2 + $0x8] sm:$0xff] %v484
      %490 = vst.msk [vmem:[#allocation2 + $0x10] sm:$0xff] %vm219, %v483
      %v491 = vld [vmem:[#allocation2] sm:$0xff]
      %v492 = vld [vmem:[#allocation2 + $0x8] sm:$0xff]
      %v493 = vld [vmem:[#allocation2 + $0x10] sm:$0xff]
      %497 = vrot.lane.b32.xlu0 %v491, 126
      %v498 = vpop.permute.xlu0 %497
      %499 = vrot.lane.b32.xlu0 %v492, 126
      %v500 = vpop.permute.xlu0 %499
      %501 = vrot.lane.b32.xlu0 %v493, 126
      %v502 = vpop.permute.xlu0 %501
      %v503 = vsel %vm240, %v498, %v500
      %v504 = vsel %vm240, %v500, %v502
      %v507 = vsel %vm198, %v503, %v491
      %v508 = vsel %vm199, %v504, %v492
      %509 = vrot.lane.b32.xlu0 %v491, 94
      %v510 = vpop.permute.xlu0 %509
      %511 = vrot.lane.b32.xlu0 %v492, 94
      %v512 = vpop.permute.xlu0 %511
      %513 = vrot.lane.b32.xlu0 %v493, 94
      %v514 = vpop.permute.xlu0 %513
      %v515 = vsel %vm253, %v510, %v512
      %v516 = vsel %vm253, %v512, %v514
      %519 = vrot.lane.b32.xlu0 %v491, 96
      %v520 = vpop.permute.xlu0 %519
      %521 = vrot.lane.b32.xlu0 %v492, 96
      %v522 = vpop.permute.xlu0 %521
      %523 = vrot.lane.b32.xlu0 %v493, 96
      %v524 = vpop.permute.xlu0 %523
      %v525 = vsel %vm264, %v520, %v522
      %v526 = vsel %vm264, %v522, %v524
      %v529 = vsel %vm198, %v515, %v525
      %v530 = vsel %vm199, %v516, %v526
      %v531 = vsel %vm202, %v529, %v507
      %v532 = vsel %vm203, %v530, %v508
      %533 = vst [vmem:[#allocation3] sm:$0xff] %v531
      %534 = vst [vmem:[#allocation3 + $0x8] sm:$0xff] %v532
      %535 = vrot.lane.b32.xlu0 %v491, 95
      %v536 = vpop.permute.xlu0 %535
      %537 = vrot.lane.b32.xlu0 %v492, 95
      %v538 = vpop.permute.xlu0 %537
      %539 = vrot.lane.b32.xlu0 %v493, 95
      %v540 = vpop.permute.xlu0 %539
      %v541 = vsel %vm281, %v536, %v538
      %v542 = vsel %vm281, %v538, %v540
      %545 = vrot.lane.b32.xlu0 %v491, 127
      %v546 = vpop.permute.xlu0 %545
      %547 = vrot.lane.b32.xlu0 %v492, 127
      %v548 = vpop.permute.xlu0 %547
      %549 = vrot.lane.b32.xlu0 %v493, 127
      %v550 = vpop.permute.xlu0 %549
      %v551 = vsel %vm292, %v546, %v548
      %v552 = vsel %vm292, %v548, %v550
      %v555 = vsel %vm202, %v541, %v551
      %v556 = vsel %vm203, %v542, %v552
      %557 = vst [vmem:[#allocation3 + $0x10] sm:$0xff] %v555
      %558 = vst [vmem:[#allocation3 + $0x18] sm:$0xff] %v556
      %v559 = vsel %vm200, %v491, %v503
      %v560 = vsel %vm201, %v492, %v504
      %v561 = vsel %vm200, %v525, %v515
      %v562 = vsel %vm201, %v526, %v516
      %v563 = vsel %vm202, %v561, %v559
      %v564 = vsel %vm203, %v562, %v560
      %565 = vst [vmem:[#allocation3 + $0x20] sm:$0xff] %v563
      %566 = vst [vmem:[#allocation3 + $0x28] sm:$0xff] %v564
      %567 = vrot.lane.b32.xlu0 %v491, 110
      %v568 = vpop.permute.xlu0 %567
      %569 = vrot.lane.b32.xlu0 %v492, 110
      %v570 = vpop.permute.xlu0 %569
      %571 = vrot.lane.b32.xlu0 %v493, 110
      %v572 = vpop.permute.xlu0 %571
      %v573 = vsel %vm315, %v568, %v570
      %v574 = vsel %vm315, %v570, %v572
      %577 = vrot.lane.b32.xlu0 %v491, 112
      %v578 = vpop.permute.xlu0 %577
      %579 = vrot.lane.b32.xlu0 %v492, 112
      %v580 = vpop.permute.xlu0 %579
      %581 = vrot.lane.b32.xlu0 %v493, 112
      %v582 = vpop.permute.xlu0 %581
      %v583 = vsel %vm326, %v578, %v580
      %v584 = vsel %vm326, %v580, %v582
      %v587 = vsel %vm198, %v573, %v583
      %v588 = vsel %vm199, %v574, %v584
      %589 = vst [vmem:[#allocation3 + $0x30] sm:$0xff] %v587
      %590 = vst [vmem:[#allocation3 + $0x38] sm:$0xff] %v588
      %591 = vrot.lane.b32.xlu0 %v491, 111
      %v592 = vpop.permute.xlu0 %591
      %593 = vrot.lane.b32.xlu0 %v492, 111
      %v594 = vpop.permute.xlu0 %593
      %595 = vrot.lane.b32.xlu0 %v493, 111
      %v596 = vpop.permute.xlu0 %595
      %v597 = vsel %vm341, %v592, %v594
      %v598 = vsel %vm341, %v594, %v596
      %601 = vst [vmem:[#allocation3 + $0x40] sm:$0xff] %v597
      %602 = vst [vmem:[#allocation3 + $0x48] sm:$0xff] %v598
      %v603 = vsel %vm200, %v583, %v573
      %v604 = vsel %vm201, %v584, %v574
      %605 = vst [vmem:[#allocation3 + $0x50] sm:$0xff] %v603
      %606 = vst [vmem:[#allocation3 + $0x58] sm:$0xff] %v604
      %v607 = vsel %vm204, %v507, %v529
      %v608 = vsel %vm205, %v508, %v530
      %609 = vst [vmem:[#allocation3 + $0x60] sm:$0xff] %v607
      %610 = vst [vmem:[#allocation3 + $0x68] sm:$0xff] %v608
      %v611 = vsel %vm204, %v551, %v541
      %v612 = vsel %vm205, %v552, %v542
      %613 = vst [vmem:[#allocation3 + $0x70] sm:$0xff] %v611
      %614 = vst [vmem:[#allocation3 + $0x78] sm:$0xff] %v612
      %v615 = vsel %vm204, %v559, %v561
      %v616 = vsel %vm205, %v560, %v562
      %617 = vst [vmem:[#allocation3 + $0x80] sm:$0xff] %v615
      %618 = vst [vmem:[#allocation3 + $0x88] sm:$0xff] %v616
      %v619 = vld [vmem:[#allocation3] sm:$0xff]
      %v620 = vld [vmem:[#allocation3 + $0x8] sm:$0xff]
      %v621 = vld [vmem:[#allocation3 + $0x10] sm:$0xff]
      %v622 = vld [vmem:[#allocation3 + $0x18] sm:$0xff]
      %v623 = vld [vmem:[#allocation3 + $0x20] sm:$0xff]
      %v624 = vld [vmem:[#allocation3 + $0x28] sm:$0xff]
      %v625 = vld [vmem:[#allocation3 + $0x30] sm:$0xff]
      %v626 = vld [vmem:[#allocation3 + $0x38] sm:$0xff]
      %v627 = vld [vmem:[#allocation3 + $0x40] sm:$0xff]
      %v628 = vld [vmem:[#allocation3 + $0x48] sm:$0xff]
      %v629 = vld [vmem:[#allocation3 + $0x50] sm:$0xff]
      %v630 = vld [vmem:[#allocation3 + $0x58] sm:$0xff]
      %v631 = vld [vmem:[#allocation3 + $0x60] sm:$0xff]
      %v632 = vld [vmem:[#allocation3 + $0x68] sm:$0xff]
      %v633 = vld [vmem:[#allocation3 + $0x70] sm:$0xff]
      %v634 = vld [vmem:[#allocation3 + $0x78] sm:$0xff]
      %v635 = vld [vmem:[#allocation3 + $0x80] sm:$0xff]
      %v636 = vld [vmem:[#allocation3 + $0x88] sm:$0xff]
      %v638 = vsel %vm382, %v477, 0
      %640 = vmatprep.subr.mxu0 %v620
      %641 = vmatpush1.msra.mxu0 %v619
      %642 = vmatprep.subr.mxu0 %v622
      %643 = vmatpush1.msra.mxu0 %v621
      %644 = vmatprep.subr.mxu0 %v624
      %645 = vmatpush1.msra.mxu0 %v623
      %646 = vmatprep.subr.mxu0 %v626
      %647 = vmatpush1.msra.mxu0 %v625
      %648 = vmatprep.subr.mxu0 %v628
      %649 = vmatpush1.msra.mxu0 %v627
      %650 = vmatprep.subr.mxu0 %v630
      %651 = vmatpush1.msra.mxu0 %v629
      %652 = vmatprep.subr.mxu0 %v632
      %653 = vmatpush1.msra.mxu0 %v631
      %654 = vmatprep.subr.mxu0 %v634
      %655 = vmatpush1.msra.mxu0 %v633
      %656 = vmatprep.subr.mxu0 %v636
      %657 = vmatpush1.msra.mxu0 %v635
      %658 = vmatprep.subr.mxu0 0.0
      %659 = vmatpush1.msra.mxu0 0.0
      %660 = vmatprep.subr.mxu0 0.0
      %661 = vmatpush1.msra.mxu0 0.0
      %662 = vmatprep.subr.mxu0 0.0
      %663 = vmatpush1.msra.mxu0 0.0
      %664 = vmatprep.subr.mxu0 0.0
      %665 = vmatpush1.msra.mxu0 0.0
      %666 = vmatprep.subr.mxu0 0.0
      %667 = vmatpush1.msra.mxu0 0.0
      %668 = vmatprep.subr.mxu0 0.0
      %669 = vmatpush1.msra.mxu0 0.0
      %670 = vmatprep.subr.mxu0 0.0
      %671 = vmatpush1.msra.mxu0 0.0
      %672 = vmatprep.subr.mxu0 0.0
      %673 = vmatpush1.msra.mxu0 0.0
      %674 = vmatprep.subr.mxu0 0.0
      %675 = vmatpush1.msra.mxu0 0.0
      %676 = vmatprep.subr.mxu0 0.0
      %677 = vmatpush1.msra.mxu0 0.0
      %678 = vmatprep.subr.mxu0 0.0
      %679 = vmatpush1.msra.mxu0 0.0
      %680 = vmatprep.subr.mxu0 0.0
      %681 = vmatpush1.msra.mxu0 0.0
      %682 = vmatprep.subr.mxu0 0.0
      %683 = vmatpush1.msra.mxu0 0.0
      %684 = vmatprep.subr.mxu0 0.0
      %685 = vmatpush1.msra.mxu0 0.0
      %686 = vmatprep.subr.mxu0 0.0
      %687 = vmatpush1.msra.mxu0 0.0
      %688 = vmatprep.subr.mxu0 0.0
      %689 = vmatpush1.msra.mxu0 0.0
      %690 = vmatprep.subr.mxu0 0.0
      %691 = vmatpush1.msra.mxu0 0.0
      %692 = vmatprep.subr.mxu0 0.0
      %693 = vmatpush1.msra.mxu0 0.0
      %694 = vmatprep.subr.mxu0 0.0
      %695 = vmatpush1.msra.mxu0 0.0
      %696 = vmatprep.subr.mxu0 0.0
      %697 = vmatpush1.msra.mxu0 0.0
      %698 = vmatprep.subr.mxu0 0.0
      %699 = vmatpush1.msra.mxu0 0.0
      %700 = vmatprep.subr.mxu0 0.0
      %701 = vmatpush1.msra.mxu0 0.0
      %702 = vmatprep.subr.mxu0 0.0
      %703 = vmatpush1.msra.mxu0 0.0
      %704 = vmatprep.mubr.f32.mxu0 0.0
      %705 = vmatmul.mubr.f32.gmra.mrb[0].mxu0 %v638
      %v706 = vpop.f32.mrb[0].mxu0
      %v707 = vadd.f32 0.0, %v706
      %v708 = vpop.f32.mrb[0].mxu0
      %v709 = vadd.f32 0.0, %v708
      %710 = vdwg.mxu0
      %v711 = vadd.f32 %v707, %v709
      %712 = vadd.xlane.f32.xlu0 %v711
      %v713 = vpop.xlane.xlu0 %712
      %v714 = vmul.f32 %v713, 0.00390625
      %v715 = vmul.f32 %v707, %v707
      %v716 = vmul.f32 %v709, %v709
      %v717 = vadd.f32 %v715, %v716
      %718 = vadd.xlane.f32.xlu0 %v717
      %v719 = vpop.xlane.xlu0 %718
      %v720 = vmul.f32 %v719, 0.00390625
      %v721 = vmul.f32 %v714, %v714
      %v722 = vsub.f32 %v720, %v721
      %v723 = vsub.f32 %v707, %v714
      %v724 = vsub.f32 %v709, %v714
      %v725 = vadd.f32 %v722, 1e-05
      %v726 = vrsqrt.pop %v725
      %v727 = vmul.f32 %v723, %v726
      %v728 = vmul.f32 %v724, %v726
      %v729 = vadd.f32 %v210, %v727
      %v730 = vadd.f32 %v211, %v728
      %731 = vst [vmem:[%s170] sm:$0xff] %v729
      %732 = vst [vmem:[%s170 + $0x8] sm:$0xff] %v730
      %p733 = scmp.lt.s32.totalorder %s14, 1
      %s734 = scalar_select %p733, %s14, 1
      %s735 = smul.addr %s734, 2
      %s736 = smul.addr %s735, 8
      %s737 = scalar_lea.vmem %s3, %s736
      // Predicated region
      $region33: #{resnet_block_forward.1} parent=31 // pred_check
        %p738 = pneg %p100
      $region34: #{resnet_block_forward.1} parent=31 // pred_check_branch
        %740 = sbr.rel (%p738) target = $region36
      $region35: #{resnet_block_forward.1} parent=31 // pred_region
        _
      $region36: #{resnet_block_forward.1} parent=31 // pred_fallthru
        _
    $region32: #{resnet_block_forward.1} parent=5 // pred_fallthru
      _
    %p741 = scmp.le.s32.totalorder 2, %s9
    // Predicated region
    $region37: #{resnet_block_forward.1} parent=5 // pred_check
      %p742 = pneg %p741
    $region38: #{resnet_block_forward.1} parent=5 // pred_check_branch
      %744 = sbr.rel (%p742) target = $region40
    $region39: #{resnet_block_forward.1} parent=5 // pred_region
      %s745 = ssub.s32 %s9, 2
      // Predicated region
      $region41: #{resnet_block_forward.1} parent=39 // pred_check
        %p746 = pneg %p106
      $region42: #{resnet_block_forward.1} parent=39 // pred_check_branch
        %748 = sbr.rel (%p746) target = $region44
      $region43: #{resnet_block_forward.1} parent=39 // pred_region
        %p749 = scmp.lt.s32.totalorder %s15, 1
        %s750 = scalar_select %p749, %s15, 1
        %s751 = smul.addr %s750, 2
        %s752 = smul.addr %s751, 8
        %s753 = scalar_lea.vmem %s3, %s752
      $region44: #{resnet_block_forward.1} parent=39 // pred_fallthru
        _
    $region40: #{resnet_block_forward.1} parent=5 // pred_fallthru
      _
  $region6: #{resnet_block_forward.1} parent=0 // loop_footer
    %s13 = sadd.s32 1, %s9
  $region7: #{resnet_block_forward.1} parent=0 // loop_footer_branch
    %8 = sbr.rel target = $region3
  $region8: #{resnet_block_forward.1} parent=0 // loop_exit
    _

</llo_original>
